<compile_context>
chip_gen: v7x
topology: tpu7x:2x2x1
jax: 0.10.0
libtpu: 0.0.40
codegen_flags: <defaults>
</compile_context>

<pallas_src>
import functools

import jax
import jax.numpy as jnp
from jax import lax
from jax.experimental import pallas as pl
from jax.experimental.pallas import tpu as pltpu

LN_EPS = 1e-5  # torch.nn.LayerNorm default


def _round_up(v, m):
    return ((v + m - 1) // m) * m


# ---------------- kernels ----------------

def _ffn_ln_resident_kernel(x_ref, w1_ref, b1_ref, w2_ref, b2_ref, g_ref, beta_ref,
                            o_ref, *, compute_dtype):
    """Weights fully VMEM-resident; grid = (row_tiles,)."""
    x32 = x_ref[...].astype(jnp.float32)
    h = jnp.dot(x_ref[...].astype(compute_dtype), w1_ref[...],
                preferred_element_type=jnp.float32) + b1_ref[...]
    h = jnp.maximum(h, 0.0)                                      # ReLU (f32, VPU)
    y = jnp.dot(h.astype(compute_dtype), w2_ref[...],
                preferred_element_type=jnp.float32) + b2_ref[...] + x32
    # TODO(synk): nn.Dropout is identity in eval mode; training-mode dropout omitted.
    mu = jnp.mean(y, axis=-1, keepdims=True)
    var = jnp.mean((y - mu) * (y - mu), axis=-1, keepdims=True)
    o_ref[...] = (((y - mu) * lax.rsqrt(var + LN_EPS)) * g_ref[...]
                  + beta_ref[...]).astype(o_ref.dtype)


def _ffn_ln_stream_kernel(x_ref, w1_ref, b1_ref, w2_ref, b2_ref, g_ref, beta_ref,
                          o_ref, acc_ref, xc_ref, *, compute_dtype):
    """Weights streamed in d_hid chunks; grid = (row_tiles, hid_chunks), axis 1 reduced."""
    k = pl.program_id(1)

    @pl.when(k == 0)
    def _():
        acc_ref[...] = jnp.zeros_like(acc_ref)
        xc_ref[...] = x_ref[...].astype(compute_dtype)   # cast the x tile once per row tile

    # first linear (one d_hid chunk) + ReLU; bf16 MXU operands, f32 accumulation
    h = jnp.dot(xc_ref[...], w1_ref[...],
                preferred_element_type=jnp.float32) + b1_ref[...]
    h = jnp.maximum(h, 0.0)
    # second linear: accumulate this chunk's contribution in f32
    acc_ref[...] += jnp.dot(h.astype(compute_dtype), w2_ref[...],
                            preferred_element_type=jnp.float32)

    @pl.when(k == pl.num_programs(1) - 1)
    def _():
        # TODO(synk): nn.Dropout is identity in eval mode; training-mode dropout omitted.
        y = acc_ref[...] + b2_ref[...] + x_ref[...].astype(jnp.float32)
        mu = jnp.mean(y, axis=-1, keepdims=True)
        var = jnp.mean((y - mu) * (y - mu), axis=-1, keepdims=True)
        o_ref[...] = (((y - mu) * lax.rsqrt(var + LN_EPS)) * g_ref[...]
                      + beta_ref[...]).astype(o_ref.dtype)


# ---------------- VMEM estimates (include default 2x double-buffering) ----------------

def _resident_vmem_bytes(tm, d_in, d_hid, xb, ob, cb):
    return (2 * 2 * d_in * d_hid * cb            # W1 + W2 (worst case: double-buffered)
            + 2 * d_hid * 4                      # b1
            + 2 * tm * d_in * (xb + ob)          # x / out tiles, double-buffered
            + tm * d_hid * (4 + cb)              # h (f32) + bf16 copy for 2nd matmul
            + tm * d_in * 4                      # LayerNorm f32 temporaries
            + 6 * d_in * 4)                      # b2 / gamma / beta


def _stream_vmem_bytes(tm, tk, d_in, xb, ob, cb):
    return (2 * (d_in * tk + tk * d_in) * cb     # W1 / W2 chunks, double-buffered
            + 2 * tk * 4                         # b1 chunk
            + 2 * tm * d_in * (xb + ob)          # x / out tiles, double-buffered
            + tm * d_in * (4 + cb + 4)           # f32 acc + x scratch + LN temporaries
            + tm * tk * (4 + cb)                 # h chunk (f32) + bf16 copy
            + 6 * d_in * 4)                      # b2 / gamma / beta


# ---------------- wrapper ----------------

def positionwise_ffn(params, x, *, tm=512, tk=512, compute_dtype=jnp.bfloat16,
                     vmem_budget_bytes=None, force_streaming=False):
    """y = LayerNorm(w2(relu(w1(x))) + x), applied over the last dim of x.

    Use compute_dtype=jnp.float32 for strict f32 parity (slower on the MXU).
    """
    orig_shape = x.shape
    orig_dtype = x.dtype
    d_in = orig_shape[-1]
    d_hid = params["w1"].shape[1]

    # Activations keep their native dtype in HBM; math inside the kernel is f32.
    x2d = x.reshape(-1, d_in)
    m = x2d.shape[0]

    # Weights go to the MXU in compute_dtype (bf16 by default); cast ONCE here.
    w1 = params["w1"].astype(compute_dtype)
    w2 = params["w2"].astype(compute_dtype)
    b1 = params["b1"].reshape(1, d_hid).astype(jnp.float32)
    b2 = params["b2"].reshape(1, d_in).astype(jnp.float32)
    g = params["ln_gamma"].reshape(1, d_in).astype(jnp.float32)
    beta = params["ln_beta"].reshape(1, d_in).astype(jnp.float32)

    xb = x2d.dtype.itemsize
    ob = jnp.dtype(orig_dtype).itemsize
    cb = jnp.dtype(compute_dtype).itemsize

    if vmem_budget_bytes is None:
        try:
            vmem_budget_bytes = int(pltpu.get_tpu_info().vmem_capacity_bytes)
        except Exception:
            vmem_budget_bytes = 64 * 1024 * 1024   # conservative: v7x physical VMEM
    budget = int(0.75 * vmem_budget_bytes)          # headroom for compiler scratch

    # ---- row tiling: multiples of 8 (defaults are 256-friendly for v6e/v7x MXU) ----
    tm = _round_up(max(8, min(tm, m)), 8)
    # keep >= 2 row tiles when there is enough work so v7x's two TensorCores both run
    if m > 256 and _round_up(m, tm) // tm < 2:
        tm = _round_up(-(-m // 2), 8)

    use_resident = (not force_streaming) and (
        _resident_vmem_bytes(tm, d_in, d_hid, xb, ob, cb) <= budget)

    if use_resident:
        while _resident_vmem_bytes(tm, d_in, d_hid, xb, ob, cb) > budget and tm > 8:
            tm = _round_up(max(8, tm // 2), 8)
    else:
        # ---- hidden-dim chunking: tk multiple of 128 (256 preferred), d_hid zero-padded ----
        tk = min(tk, _round_up(d_hid, 128))
        tk = _round_up(tk, 256) if tk >= 256 else _round_up(tk, 128)
        while _stream_vmem_bytes(tm, tk, d_in, xb, ob, cb) > budget and tk > 128:
            tk = max(128, _round_up(tk // 2, 128))
        while _stream_vmem_bytes(tm, tk, d_in, xb, ob, cb) > budget and tm > 8:
            tm = _round_up(max(8, tm // 2), 8)

    m_pad = _round_up(m, tm)
    if m_pad != m:
        # padded zero rows are harmless (LayerNorm of a constant row is finite), sliced off
        x2d = jnp.pad(x2d, ((0, m_pad - m), (0, 0)))

    if use_resident:
        est = _resident_vmem_bytes(tm, d_in, d_hid, xb, ob, cb)
    else:
        d_hid_pad = _round_up(d_hid, tk)
        if d_hid_pad != d_hid:
            # zero-padded hidden units: relu(0 + 0) @ zero rows of W2 contributes exactly 0
            w1 = jnp.pad(w1, ((0, 0), (0, d_hid_pad - d_hid)))
            b1 = jnp.pad(b1, ((0, 0), (0, d_hid_pad - d_hid)))
            w2 = jnp.pad(w2, ((0, d_hid_pad - d_hid), (0, 0)))
        est = _stream_vmem_bytes(tm, tk, d_in, xb, ob, cb)

    vmem_limit = int(min(vmem_budget_bytes, max(est + (8 << 20), 32 << 20)))

    if use_resident:
        kernel = functools.partial(_ffn_ln_resident_kernel, compute_dtype=compute_dtype)
        y2d = pl.pallas_call(
            kernel,
            grid=(m_pad // tm,),
            in_specs=[
                pl.BlockSpec((tm, d_in), lambda i: (i, 0)),        # x row tile
                pl.BlockSpec((d_in, d_hid), lambda i: (0, 0)),     # W1 (resident, bf16)
                pl.BlockSpec((1, d_hid), lambda i: (0, 0)),        # b1
                pl.BlockSpec((d_hid, d_in), lambda i: (0, 0)),     # W2 (resident, bf16)
                pl.BlockSpec((1, d_in), lambda i: (0, 0)),         # b2
                pl.BlockSpec((1, d_in), lambda i: (0, 0)),         # ln gamma
                pl.BlockSpec((1, d_in), lambda i: (0, 0)),         # ln beta
            ],
            out_specs=pl.BlockSpec((tm, d_in), lambda i: (i, 0)),
            out_shape=jax.ShapeDtypeStruct((m_pad, d_in), orig_dtype),
            compiler_params=pltpu.CompilerParams(
                dimension_semantics=("parallel",),
                vmem_limit_bytes=vmem_limit),
        )(x2d, w1, b1, w2, b2, g, beta)
    else:
        kernel = functools.partial(_ffn_ln_stream_kernel, compute_dtype=compute_dtype)
        y2d = pl.pallas_call(
            kernel,
            grid=(m_pad // tm, d_hid_pad // tk),
            in_specs=[
                pl.BlockSpec((tm, d_in), lambda i, k: (i, 0)),     # x tile (resident over k)
                pl.BlockSpec((d_in, tk), lambda i, k: (0, k)),     # W1 chunk (bf16)
                pl.BlockSpec((1, tk), lambda i, k: (0, k)),        # b1 chunk
                pl.BlockSpec((tk, d_in), lambda i, k: (k, 0)),     # W2 chunk (bf16)
                pl.BlockSpec((1, d_in), lambda i, k: (0, 0)),      # b2
                pl.BlockSpec((1, d_in), lambda i, k: (0, 0)),      # ln gamma
                pl.BlockSpec((1, d_in), lambda i, k: (0, 0)),      # ln beta
            ],
            out_specs=pl.BlockSpec((tm, d_in), lambda i, k: (i, 0)),
            out_shape=jax.ShapeDtypeStruct((m_pad, d_in), orig_dtype),
            scratch_shapes=[pltpu.VMEM((tm, d_in), jnp.float32),     # f32 accumulator
                            pltpu.VMEM((tm, d_in), compute_dtype)],  # x tile in MXU dtype
            compiler_params=pltpu.CompilerParams(
                dimension_semantics=("parallel", "arbitrary"),
                vmem_limit_bytes=vmem_limit),
        )(x2d, w1, b1, w2, b2, g, beta)

    return y2d[:m].reshape(orig_shape)


# ---------------- reference (plain JAX, f32) ----------------

def _reference(params, x):
    h = jnp.maximum(x @ params["w1"] + params["b1"], 0.0)
    y = h @ params["w2"] + params["b2"] + x
    mu = jnp.mean(y, axis=-1, keepdims=True)
    var = jnp.mean((y - mu) ** 2, axis=-1, keepdims=True)
    return (y - mu) * lax.rsqrt(var + LN_EPS) * params["ln_gamma"] + params["ln_beta"]


# ---------------- demo ----------------

if __name__ == "__main__":
    B, N, D_IN, D_HID = 2, 8, 32, 256   # small shapes

    key = jax.random.PRNGKey(0)
    k1, k2, k3, k4, kx = jax.random.split(key, 5)
    bound1 = 1.0 / (D_IN ** 0.5)
    bound2 = 1.0 / (D_HID ** 0.5)
    params = {
        "w1": jax.random.uniform(k1, (D_IN, D_HID), jnp.float32, -bound1, bound1),
        "b1": jax.random.uniform(k2, (1, D_HID), jnp.float32, -bound1, bound1),
        "w2": jax.random.uniform(k3, (D_HID, D_IN), jnp.float32, -bound2, bound2),
        "b2": jax.random.uniform(k4, (1, D_IN), jnp.float32, -bound2, bound2),
        "ln_gamma": jnp.ones((1, D_IN), jnp.float32),
        "ln_beta": jnp.zeros((1, D_IN), jnp.float32),
    }
    x = jax.random.normal(kx, (B, N, D_IN), jnp.float32)

    y_ref = _reference(params, x)

    # resident fast path (weights fit VMEM at these shapes)
    y_res = jax.block_until_ready(positionwise_ffn(params, x))
    # streaming path (forced, tk=128 -> 2 hidden-dim chunks) to exercise the reduction pipeline
    y_str = jax.block_until_ready(
        positionwise_ffn(params, x, tk=128, force_streaming=True))

    for name, y in (("resident", y_res), ("streaming", y_str)):
        assert y.shape == x.shape and y.dtype == x.dtype, name
        assert bool(jnp.all(jnp.isfinite(y))), name
        err = float(jnp.max(jnp.abs(y - y_ref)))
        assert err < 5e-2, f"{name} path: max abs err vs reference = {err}"

    print("KERNEL_OK")
</pallas_src>

<mosaic_0001>
module attributes {stable_mosaic.version = 11 : i64} {
  func.func @_ffn_ln_resident_kernel(%arg0: i32, %arg1: memref<16x32xf32, #tpu.memory_space<vmem>>, %arg2: memref<32x256xbf16, #tpu.memory_space<vmem>>, %arg3: memref<1x256xf32, #tpu.memory_space<vmem>>, %arg4: memref<256x32xbf16, #tpu.memory_space<vmem>>, %arg5: memref<1x32xf32, #tpu.memory_space<vmem>>, %arg6: memref<1x32xf32, #tpu.memory_space<vmem>>, %arg7: memref<1x32xf32, #tpu.memory_space<vmem>>, %arg8: memref<16x32xf32, #tpu.memory_space<vmem>>) attributes {dimension_semantics = [#tpu.dimension_semantics<parallel>], iteration_bounds = array<i64: 1>, scalar_prefetch = 0 : i64, scratch_operands = 0 : i64, tpu.core_type = #tpu.core_type<tc>, window_params = [{transform_indices = @transform_0, window_bounds = array<i64: 16, 32>}, {pipeline_mode = #tpu.pipeline_mode<synchronous>, transform_indices = @transform_1, window_bounds = array<i64: 32, 256>}, {pipeline_mode = #tpu.pipeline_mode<synchronous>, transform_indices = @transform_2, window_bounds = array<i64: 1, 256>}, {pipeline_mode = #tpu.pipeline_mode<synchronous>, transform_indices = @transform_3, window_bounds = array<i64: 256, 32>}, {pipeline_mode = #tpu.pipeline_mode<synchronous>, transform_indices = @transform_4, window_bounds = array<i64: 1, 32>}, {pipeline_mode = #tpu.pipeline_mode<synchronous>, transform_indices = @transform_5, window_bounds = array<i64: 1, 32>}, {pipeline_mode = #tpu.pipeline_mode<synchronous>, transform_indices = @transform_6, window_bounds = array<i64: 1, 32>}, {transform_indices = @transform_7, window_bounds = array<i64: 16, 32>}]} {
    %c0 = arith.constant 0 : index
    %c0_0 = arith.constant 0 : index
    %0 = vector.load %arg1[%c0, %c0_0] : memref<16x32xf32, #tpu.memory_space<vmem>>, vector<16x32xf32>
    %c0_1 = arith.constant 0 : index
    %c0_2 = arith.constant 0 : index
    %1 = vector.load %arg1[%c0_1, %c0_2] : memref<16x32xf32, #tpu.memory_space<vmem>>, vector<16x32xf32>
    %2 = arith.truncf %1 : vector<16x32xf32> to vector<16x32xbf16>
    %c0_3 = arith.constant 0 : index
    %c0_4 = arith.constant 0 : index
    %3 = vector.load %arg2[%c0_3, %c0_4] : memref<32x256xbf16, #tpu.memory_space<vmem>>, vector<32x256xbf16>
    %cst = arith.constant dense<0.000000e+00> : vector<16x256xf32>
    %4 = tpu.matmul %2, %3, %cst {dimension_numbers = #tpu.dot_dimension_numbers<[1], [0], [0], [1], [0, 0, 1, 1], [], []>} : vector<16x32xbf16>, vector<32x256xbf16>, vector<16x256xf32> -> vector<16x256xf32>
    %c0_5 = arith.constant 0 : index
    %c0_6 = arith.constant 0 : index
    %5 = vector.load %arg3[%c0_5, %c0_6] : memref<1x256xf32, #tpu.memory_space<vmem>>, vector<1x256xf32>
    %6 = vector.broadcast %5 : vector<1x256xf32> to vector<16x256xf32>
    %7 = arith.addf %4, %6 : vector<16x256xf32>
    %cst_7 = arith.constant 0.000000e+00 : f32
    %8 = vector.broadcast %cst_7 : f32 to vector<16x256xf32>
    %9 = arith.maximumf %7, %8 : vector<16x256xf32>
    %10 = arith.truncf %9 : vector<16x256xf32> to vector<16x256xbf16>
    %c0_8 = arith.constant 0 : index
    %c0_9 = arith.constant 0 : index
    %11 = vector.load %arg4[%c0_8, %c0_9] : memref<256x32xbf16, #tpu.memory_space<vmem>>, vector<256x32xbf16>
    %cst_10 = arith.constant dense<0.000000e+00> : vector<16x32xf32>
    %12 = tpu.matmul %10, %11, %cst_10 {dimension_numbers = #tpu.dot_dimension_numbers<[1], [0], [0], [1], [0, 0, 1, 1], [], []>} : vector<16x256xbf16>, vector<256x32xbf16>, vector<16x32xf32> -> vector<16x32xf32>
    %c0_11 = arith.constant 0 : index
    %c0_12 = arith.constant 0 : index
    %13 = vector.load %arg5[%c0_11, %c0_12] : memref<1x32xf32, #tpu.memory_space<vmem>>, vector<1x32xf32>
    %14 = vector.broadcast %13 : vector<1x32xf32> to vector<16x32xf32>
    %15 = arith.addf %12, %14 : vector<16x32xf32>
    %16 = arith.addf %15, %0 : vector<16x32xf32>
    %cst_13 = arith.constant dense<0.000000e+00> : vector<16xf32>
    %17 = vector.multi_reduction <add>, %16, %cst_13 [1] : vector<16x32xf32> to vector<16xf32>
    %18 = vector.shape_cast %17 : vector<16xf32> to vector<16x1xf32>
    %cst_14 = arith.constant 3.200000e+01 : f32
    %19 = vector.broadcast %cst_14 : f32 to vector<16x1xf32>
    %20 = arith.divf %18, %19 : vector<16x1xf32>
    %21 = vector.broadcast %20 : vector<16x1xf32> to vector<16x32xf32>
    %22 = arith.subf %16, %21 : vector<16x32xf32>
    %23 = vector.broadcast %20 : vector<16x1xf32> to vector<16x32xf32>
    %24 = arith.subf %16, %23 : vector<16x32xf32>
    %25 = arith.mulf %22, %24 : vector<16x32xf32>
    %cst_15 = arith.constant dense<0.000000e+00> : vector<16xf32>
    %26 = vector.multi_reduction <add>, %25, %cst_15 [1] : vector<16x32xf32> to vector<16xf32>
    %27 = vector.shape_cast %26 : vector<16xf32> to vector<16x1xf32>
    %cst_16 = arith.constant 3.200000e+01 : f32
    %28 = vector.broadcast %cst_16 : f32 to vector<16x1xf32>
    %29 = arith.divf %27, %28 : vector<16x1xf32>
    %30 = vector.broadcast %20 : vector<16x1xf32> to vector<16x32xf32>
    %31 = arith.subf %16, %30 : vector<16x32xf32>
    %cst_17 = arith.constant 9.99999974E-6 : f32
    %32 = vector.broadcast %cst_17 : f32 to vector<16x1xf32>
    %33 = arith.addf %29, %32 : vector<16x1xf32>
    %34 = math.rsqrt %33 : vector<16x1xf32>
    %35 = vector.broadcast %34 : vector<16x1xf32> to vector<16x32xf32>
    %36 = arith.mulf %31, %35 : vector<16x32xf32>
    %c0_18 = arith.constant 0 : index
    %c0_19 = arith.constant 0 : index
    %37 = vector.load %arg6[%c0_18, %c0_19] : memref<1x32xf32, #tpu.memory_space<vmem>>, vector<1x32xf32>
    %38 = vector.broadcast %37 : vector<1x32xf32> to vector<16x32xf32>
    %39 = arith.mulf %36, %38 : vector<16x32xf32>
    %c0_20 = arith.constant 0 : index
    %c0_21 = arith.constant 0 : index
    %40 = vector.load %arg7[%c0_20, %c0_21] : memref<1x32xf32, #tpu.memory_space<vmem>>, vector<1x32xf32>
    %41 = vector.broadcast %40 : vector<1x32xf32> to vector<16x32xf32>
    %42 = arith.addf %39, %41 : vector<16x32xf32>
    %c0_22 = arith.constant 0 : index
    %c0_23 = arith.constant 0 : index
    %43 = vector.load %arg8[%c0_22, %c0_23] : memref<16x32xf32, #tpu.memory_space<vmem>>, vector<16x32xf32>
    tpu.vector_store %arg8[%c0_22, %c0_23], %42 {strides = array<i32>} : memref<16x32xf32, #tpu.memory_space<vmem>>, vector<16x32xf32>,
    return
  }
  func.func @transform_0(%arg0: i32) -> (i32, i32) {
    %c0_i32 = arith.constant 0 : i32
    %c0_i32_0 = arith.constant 0 : i32
    return %arg0, %c0_i32 : i32, i32
  }
  func.func @transform_1(%arg0: i32) -> (i32, i32) {
    %c0_i32 = arith.constant 0 : i32
    %c0_i32_0 = arith.constant 0 : i32
    %c0_i32_1 = arith.constant 0 : i32
    return %c0_i32, %c0_i32_0 : i32, i32
  }
  func.func @transform_2(%arg0: i32) -> (i32, i32) {
    %c0_i32 = arith.constant 0 : i32
    %c0_i32_0 = arith.constant 0 : i32
    %c0_i32_1 = arith.constant 0 : i32
    return %c0_i32, %c0_i32_0 : i32, i32
  }
  func.func @transform_3(%arg0: i32) -> (i32, i32) {
    %c0_i32 = arith.constant 0 : i32
    %c0_i32_0 = arith.constant 0 : i32
    %c0_i32_1 = arith.constant 0 : i32
    return %c0_i32, %c0_i32_0 : i32, i32
  }
  func.func @transform_4(%arg0: i32) -> (i32, i32) {
    %c0_i32 = arith.constant 0 : i32
    %c0_i32_0 = arith.constant 0 : i32
    %c0_i32_1 = arith.constant 0 : i32
    return %c0_i32, %c0_i32_0 : i32, i32
  }
  func.func @transform_5(%arg0: i32) -> (i32, i32) {
    %c0_i32 = arith.constant 0 : i32
    %c0_i32_0 = arith.constant 0 : i32
    %c0_i32_1 = arith.constant 0 : i32
    return %c0_i32, %c0_i32_0 : i32, i32
  }
  func.func @transform_6(%arg0: i32) -> (i32, i32) {
    %c0_i32 = arith.constant 0 : i32
    %c0_i32_0 = arith.constant 0 : i32
    %c0_i32_1 = arith.constant 0 : i32
    return %c0_i32, %c0_i32_0 : i32, i32
  }
  func.func @transform_7(%arg0: i32) -> (i32, i32) {
    %c0_i32 = arith.constant 0 : i32
    %c0_i32_0 = arith.constant 0 : i32
    return %arg0, %c0_i32 : i32, i32
  }
}

</mosaic_0001>

<llo_original>
// kernel: tpu_custom_call.1
$region0: #{tpu_custom_call.1}
  #allocation0 [shape = 'u32[]', space=smem, size = 0x4, offset = 0x4, fixed_abs, tag = 'smem constant byte address 0x4 - core index']
  #allocation1 [shape = 'u32[144,128]{1,0:T(1,128)}', space=vmem, size = 0x12000, scoped, tag = 'internal scratch']
  %s0 = inlined_call_operand.vmem [shape: f32[16,32], index: 0, kind: input, shape index: {}]
  %s1 = inlined_call_operand.vmem [shape: bf16[32,256], index: 1, kind: input, shape index: {}]
  %s2 = inlined_call_operand.vmem [shape: f32[1,256], index: 2, kind: input, shape index: {}]
  %s3 = inlined_call_operand.vmem [shape: bf16[256,32], index: 3, kind: input, shape index: {}]
  %s4 = inlined_call_operand.vmem [shape: f32[1,32], index: 4, kind: input, shape index: {}]
  %s5 = inlined_call_operand.vmem [shape: f32[1,32], index: 5, kind: input, shape index: {}]
  %s6 = inlined_call_operand.vmem [shape: f32[1,32], index: 6, kind: input, shape index: {}]
  %s7 = inlined_call_operand.hbm [shape: f32[16,32], index: 7, kind: output, shape index: {}]
  %s8 = sld [smem:[#allocation0]]
  $region38: #{tpu_custom_call.1} parent=0
    _
  %s10 = ssub.s32 1, %s8
  %s11 = scalar_select 0, %s10, %s8
  $region1: #{tpu_custom_call.1} parent=0
    #allocation2 [shape = 'u8[8192]{0}', space=vmem, size = 0x2000, scoped, tag = 'output window, operand 0, single buffered']
    #allocation3 [shape = 's32[1]{0}', space=sflag, size = 0x4, scoped, tag = 'scoped memory for tpu_custom_call.1']
    %12 = vsyncpa [#allocation3], 0
    // Predicated region
    $region2: #{tpu_custom_call.1} parent=1 // pred_check
      _
    $region3: #{tpu_custom_call.1} parent=1 // pred_check_branch
      %14 = sbr.rel (0) target = $region5
    $region4: #{tpu_custom_call.1} parent=1 // pred_region
      _
    $region5: #{tpu_custom_call.1} parent=1 // pred_fallthru
      _
    // Predicated region
    $region6: #{tpu_custom_call.1} parent=1 // pred_check
      _
    $region7: #{tpu_custom_call.1} parent=1 // pred_check_branch
      %16 = sbr.rel (0) target = $region9
    $region8: #{tpu_custom_call.1} parent=1 // pred_region
      _
    $region9: #{tpu_custom_call.1} parent=1 // pred_fallthru
      _
    // Predicated region
    $region10: #{tpu_custom_call.1} parent=1 // pred_check
      _
    $region11: #{tpu_custom_call.1} parent=1 // pred_check_branch
      %18 = sbr.rel (0) target = $region13
    $region12: #{tpu_custom_call.1} parent=1 // pred_region
      _
    $region13: #{tpu_custom_call.1} parent=1 // pred_fallthru
      _
    // Predicated region
    $region14: #{tpu_custom_call.1} parent=1 // pred_check
      _
    $region15: #{tpu_custom_call.1} parent=1 // pred_check_branch
      %20 = sbr.rel (0) target = $region17
    $region16: #{tpu_custom_call.1} parent=1 // pred_region
      _
    $region17: #{tpu_custom_call.1} parent=1 // pred_fallthru
      _
    // Predicated region
    $region18: #{tpu_custom_call.1} parent=1 // pred_check
      _
    $region19: #{tpu_custom_call.1} parent=1 // pred_check_branch
      %22 = sbr.rel (0) target = $region21
    $region20: #{tpu_custom_call.1} parent=1 // pred_region
      _
    $region21: #{tpu_custom_call.1} parent=1 // pred_fallthru
      _
    // Predicated region
    $region22: #{tpu_custom_call.1} parent=1 // pred_check
      _
    $region23: #{tpu_custom_call.1} parent=1 // pred_check_branch
      %24 = sbr.rel (0) target = $region25
    $region24: #{tpu_custom_call.1} parent=1 // pred_region
      _
    $region25: #{tpu_custom_call.1} parent=1 // pred_fallthru
      _
    // Predicated region
    $region26: #{tpu_custom_call.1} parent=1 // pred_check
      _
    $region27: #{tpu_custom_call.1} parent=1 // pred_check_branch
      %26 = sbr.rel (0) target = $region29
    $region28: #{tpu_custom_call.1} parent=1 // pred_region
      _
    $region29: #{tpu_custom_call.1} parent=1 // pred_fallthru
      _
    %v28 = vld [vmem:[%s0] sm:$0xff]
    %v29 = vld [vmem:[%s0 + $0x8] sm:$0xff]
    %v30 = vpack.c.bf16 %v29, %v28
    %v31 = vld [vmem:[%s1] sm:$0xff]
    %v32 = vld [vmem:[%s1 + $0x8] sm:$0xff]
    %v33 = vld [vmem:[%s1 + $0x10] sm:$0xff]
    %v34 = vld [vmem:[%s1 + $0x18] sm:$0xff]
    %v35 = vld [vmem:[%s2] sm:$0x3]
    %v37 = vlaneseq
    %v38 = vshrl.u32 %v37, 7
    %v39 = vsub.s32 0, %v38
    %v40 = vrot.slane %v35, %v39
    %v41 = vlaneseq
    %v42 = vshrl.u32 %v41, 7
    %v43 = vsub.s32 1, %v42
    %v44 = vrot.slane %v35, %v43
    %v51 = vunpack.c.l.b16 %v31
    %v52 = vunpack.c.h.b16 %v31
    %v53 = vunpack.c.l.b16 %v32
    %v54 = vunpack.c.h.b16 %v32
    %v55 = vunpack.c.l.b16 %v33
    %v56 = vunpack.c.h.b16 %v33
    %v57 = vunpack.c.l.b16 %v34
    %v58 = vunpack.c.h.b16 %v34
    %v59 = vpack.c.b16 %v53, %v51
    %v60 = vpack.c.b16 %v54, %v52
    %v61 = vpack.c.b16 %v57, %v55
    %v62 = vpack.c.b16 %v58, %v56
    %vm67 = vcmask 261120
    %v69 = vsel %vm67, %v30, 0
    %71 = vmatprep.subr.bf16.mxu0 %v60
    %72 = vmatpush1.bf16.msra.mxu0 %v59
    %73 = vmatprep.subr.bf16.mxu0 %v62
    %74 = vmatpush1.bf16.msra.mxu0 %v61
    %75 = vmatprep.subr.bf16.mxu0 0
    %76 = vmatpush1.bf16.msra.mxu0 0
    %77 = vmatprep.subr.bf16.mxu0 0
    %78 = vmatpush1.bf16.msra.mxu0 0
    %79 = vmatprep.subr.bf16.mxu0 0
    %80 = vmatpush1.bf16.msra.mxu0 0
    %81 = vmatprep.subr.bf16.mxu0 0
    %82 = vmatpush1.bf16.msra.mxu0 0
    %83 = vmatprep.subr.bf16.mxu0 0
    %84 = vmatpush1.bf16.msra.mxu0 0
    %85 = vmatprep.subr.bf16.mxu0 0
    %86 = vmatpush1.bf16.msra.mxu0 0
    %87 = vmatprep.subr.bf16.mxu0 0
    %88 = vmatpush1.bf16.msra.mxu0 0
    %89 = vmatprep.subr.bf16.mxu0 0
    %90 = vmatpush1.bf16.msra.mxu0 0
    %91 = vmatprep.subr.bf16.mxu0 0
    %92 = vmatpush1.bf16.msra.mxu0 0
    %93 = vmatprep.subr.bf16.mxu0 0
    %94 = vmatpush1.bf16.msra.mxu0 0
    %95 = vmatprep.subr.bf16.mxu0 0
    %96 = vmatpush1.bf16.msra.mxu0 0
    %97 = vmatprep.subr.bf16.mxu0 0
    %98 = vmatpush1.bf16.msra.mxu0 0
    %99 = vmatprep.subr.bf16.mxu0 0
    %100 = vmatpush1.bf16.msra.mxu0 0
    %101 = vmatprep.subr.bf16.mxu0 0
    %102 = vmatpush1.bf16.msra.mxu0 0
    %103 = vmatprep.mubr.bf16.mxu0 0
    %104 = vmatmul.mubr.bf16.gmra.mrb[0].mxu0 %v69
    %v105 = vpop.f32.mrb[0].mxu0
    %v106 = vadd.f32 %v40, %v105
    %v107 = vpop.f32.mrb[0].mxu0
    %v108 = vadd.f32 %v44, %v107
    %v109 = vpop.f32.mrb[0].mxu0
    %v110 = vadd.f32 %v40, %v109
    %v111 = vpop.f32.mrb[0].mxu0
    %v112 = vadd.f32 %v44, %v111
    %113 = vdwg.mxu0
    %v114 = vmax.f32 %v106, 0.0
    %v115 = vmax.f32 %v108, 0.0
    %v116 = vmax.f32 %v110, 0.0
    %v117 = vmax.f32 %v112, 0.0
    %v118 = vpack.c.bf16 %v116, %v114
    %v119 = vpack.c.bf16 %v117, %v115
    %v120 = vld [vmem:[%s3] sm:$0xf]
    %v121 = vld [vmem:[%s3 + $0x4] sm:$0xf]
    %v122 = vld [vmem:[%s3 + $0x8] sm:$0xf]
    %v123 = vld [vmem:[%s3 + $0xc] sm:$0xf]
    %v124 = vld [vmem:[%s3 + $0x10] sm:$0xf]
    %v125 = vld [vmem:[%s3 + $0x14] sm:$0xf]
    %v126 = vld [vmem:[%s3 + $0x18] sm:$0xf]
    %v127 = vld [vmem:[%s3 + $0x1c] sm:$0xf]
    %v128 = vld [vmem:[%s3 + $0x20] sm:$0xf]
    %v129 = vld [vmem:[%s3 + $0x24] sm:$0xf]
    %v130 = vld [vmem:[%s3 + $0x28] sm:$0xf]
    %v131 = vld [vmem:[%s3 + $0x2c] sm:$0xf]
    %v132 = vld [vmem:[%s3 + $0x30] sm:$0xf]
    %v133 = vld [vmem:[%s3 + $0x34] sm:$0xf]
    %v134 = vld [vmem:[%s3 + $0x38] sm:$0xf]
    %v135 = vld [vmem:[%s3 + $0x3c] sm:$0xf]
    %v136 = vld [vmem:[%s3 + $0x40] sm:$0xf]
    %v137 = vld [vmem:[%s3 + $0x44] sm:$0xf]
    %v138 = vld [vmem:[%s3 + $0x48] sm:$0xf]
    %v139 = vld [vmem:[%s3 + $0x4c] sm:$0xf]
    %v140 = vld [vmem:[%s3 + $0x50] sm:$0xf]
    %v141 = vld [vmem:[%s3 + $0x54] sm:$0xf]
    %v142 = vld [vmem:[%s3 + $0x58] sm:$0xf]
    %v143 = vld [vmem:[%s3 + $0x5c] sm:$0xf]
    %v144 = vld [vmem:[%s3 + $0x60] sm:$0xf]
    %v145 = vld [vmem:[%s3 + $0x64] sm:$0xf]
    %v146 = vld [vmem:[%s3 + $0x68] sm:$0xf]
    %v147 = vld [vmem:[%s3 + $0x6c] sm:$0xf]
    %v148 = vld [vmem:[%s3 + $0x70] sm:$0xf]
    %v149 = vld [vmem:[%s3 + $0x74] sm:$0xf]
    %v150 = vld [vmem:[%s3 + $0x78] sm:$0xf]
    %v151 = vld [vmem:[%s3 + $0x7c] sm:$0xf]
    %v152 = vld [vmem:[%s4] sm:$0x1]
    %v154 = vlaneseq
    %v155 = vshrl.u32 %v154, 7
    %v156 = vsub.s32 0, %v155
    %v157 = vrot.slane %v152, %v156
    %v191 = vunpack.c.l.b16 %v120
    %v192 = vunpack.c.l.b16 %v121
    %v193 = vunpack.c.l.b16 %v122
    %v194 = vunpack.c.l.b16 %v123
    %v195 = vunpack.c.l.b16 %v124
    %v196 = vunpack.c.l.b16 %v125
    %v197 = vunpack.c.l.b16 %v126
    %v198 = vunpack.c.l.b16 %v127
    %v199 = vunpack.c.l.b16 %v128
    %v200 = vunpack.c.l.b16 %v129
    %v201 = vunpack.c.l.b16 %v130
    %v202 = vunpack.c.l.b16 %v131
    %v203 = vunpack.c.l.b16 %v132
    %v204 = vunpack.c.l.b16 %v133
    %v205 = vunpack.c.l.b16 %v134
    %v206 = vunpack.c.l.b16 %v135
    %v207 = vunpack.c.l.b16 %v136
    %v208 = vunpack.c.l.b16 %v137
    %v209 = vunpack.c.l.b16 %v138
    %v210 = vunpack.c.l.b16 %v139
    %v211 = vunpack.c.l.b16 %v140
    %v212 = vunpack.c.l.b16 %v141
    %v213 = vunpack.c.l.b16 %v142
    %v214 = vunpack.c.l.b16 %v143
    %v215 = vunpack.c.l.b16 %v144
    %v216 = vunpack.c.l.b16 %v145
    %v217 = vunpack.c.l.b16 %v146
    %v218 = vunpack.c.l.b16 %v147
    %v219 = vunpack.c.l.b16 %v148
    %v220 = vunpack.c.l.b16 %v149
    %v221 = vunpack.c.l.b16 %v150
    %v222 = vunpack.c.l.b16 %v151
    %v223 = vpack.c.b16 %v192, %v191
    %v224 = vpack.c.b16 %v194, %v193
    %v225 = vpack.c.b16 %v196, %v195
    %v226 = vpack.c.b16 %v198, %v197
    %v227 = vpack.c.b16 %v200, %v199
    %v228 = vpack.c.b16 %v202, %v201
    %v229 = vpack.c.b16 %v204, %v203
    %v230 = vpack.c.b16 %v206, %v205
    %v231 = vpack.c.b16 %v208, %v207
    %v232 = vpack.c.b16 %v210, %v209
    %v233 = vpack.c.b16 %v212, %v211
    %v234 = vpack.c.b16 %v214, %v213
    %v235 = vpack.c.b16 %v216, %v215
    %v236 = vpack.c.b16 %v218, %v217
    %v237 = vpack.c.b16 %v220, %v219
    %v238 = vpack.c.b16 %v222, %v221
    %255 = vmatprep.subr.bf16.mxu0 0
    %256 = vmatpush1.bf16.msra.mxu0 %v223
    %257 = vmatprep.subr.bf16.mxu0 0
    %258 = vmatpush1.bf16.msra.mxu0 %v224
    %259 = vmatprep.subr.bf16.mxu0 0
    %260 = vmatpush1.bf16.msra.mxu0 %v225
    %261 = vmatprep.subr.bf16.mxu0 0
    %262 = vmatpush1.bf16.msra.mxu0 %v226
    %263 = vmatprep.subr.bf16.mxu0 0
    %264 = vmatpush1.bf16.msra.mxu0 %v227
    %265 = vmatprep.subr.bf16.mxu0 0
    %266 = vmatpush1.bf16.msra.mxu0 %v228
    %267 = vmatprep.subr.bf16.mxu0 0
    %268 = vmatpush1.bf16.msra.mxu0 %v229
    %269 = vmatprep.subr.bf16.mxu0 0
    %270 = vmatpush1.bf16.msra.mxu0 %v230
    %271 = vmatprep.subr.bf16.mxu0 0
    %272 = vmatpush1.bf16.msra.mxu0 %v231
    %273 = vmatprep.subr.bf16.mxu0 0
    %274 = vmatpush1.bf16.msra.mxu0 %v232
    %275 = vmatprep.subr.bf16.mxu0 0
    %276 = vmatpush1.bf16.msra.mxu0 %v233
    %277 = vmatprep.subr.bf16.mxu0 0
    %278 = vmatpush1.bf16.msra.mxu0 %v234
    %279 = vmatprep.subr.bf16.mxu0 0
    %280 = vmatpush1.bf16.msra.mxu0 %v235
    %281 = vmatprep.subr.bf16.mxu0 0
    %282 = vmatpush1.bf16.msra.mxu0 %v236
    %283 = vmatprep.subr.bf16.mxu0 0
    %284 = vmatpush1.bf16.msra.mxu0 %v237
    %285 = vmatprep.subr.bf16.mxu0 0
    %286 = vmatpush1.bf16.msra.mxu0 %v238
    %287 = vmatprep.mubr.bf16.mxu0 %v119
    %288 = vmatmul.mubr.bf16.gmra.mrb[0].mxu0 %v118
    %v289 = vpop.f32.mrb[0].mxu0
    %v290 = vadd.f32 %v157, %v289
    %v291 = vpop.f32.mrb[0].mxu0
    %v292 = vpop.f32.mrb[0].mxu0
    %v293 = vadd.f32 %v157, %v292
    %v294 = vpop.f32.mrb[0].mxu0
    %295 = vdwg.mxu0
    %v296 = vadd.f32 %v290, %v28
    %v297 = vadd.f32 %v293, %v29
    %v298 = vsel %vm67, %v296, 0.0
    %299 = vadd.xlane.f32.xlu0 %v298
    %v300 = vpop.xlane.xlu0 %299
    %v301 = vsel %vm67, %v297, 0.0
    %302 = vadd.xlane.f32.xlu0 %v301
    %v303 = vpop.xlane.xlu0 %302
    %v304 = vrcp.pop 32.0
    %v305 = vmul.f32 %v300, %v304
    %v306 = vmul.f32 %v303, %v304
    %v307 = vsub.f32 %v296, %v305
    %v308 = vsub.f32 %v297, %v306
    %v309 = vmul.f32 %v307, %v307
    %v310 = vmul.f32 %v308, %v308
    %v311 = vsel %vm67, %v309, 0.0
    %312 = vadd.xlane.f32.xlu0 %v311
    %v313 = vpop.xlane.xlu0 %312
    %v314 = vsel %vm67, %v310, 0.0
    %315 = vadd.xlane.f32.xlu0 %v314
    %v316 = vpop.xlane.xlu0 %315
    %v317 = vmul.f32 %v313, %v304
    %v318 = vmul.f32 %v316, %v304
    %v319 = vadd.f32 %v317, 1e-05
    %v320 = vadd.f32 %v318, 1e-05
    %v321 = vrsqrt.pop %v319
    %v322 = vrsqrt.pop %v320
    %v323 = vmul.f32 %v307, %v321
    %v324 = vmul.f32 %v308, %v322
    %v325 = vld [vmem:[%s5] sm:$0x1]
    %v327 = vlaneseq
    %v328 = vshrl.u32 %v327, 7
    %v329 = vsub.s32 0, %v328
    %v330 = vrot.slane %v325, %v329
    %v332 = vmul.f32 %v323, %v330
    %v333 = vmul.f32 %v324, %v330
    %v334 = vld [vmem:[%s6] sm:$0x1]
    %v336 = vlaneseq
    %v337 = vshrl.u32 %v336, 7
    %v338 = vsub.s32 0, %v337
    %v339 = vrot.slane %v334, %v338
    %v341 = vadd.f32 %v332, %v339
    %v342 = vadd.f32 %v333, %v339
    %343 = vst.msk [vmem:[#allocation2] sm:$0xff] %vm67, %v341
    %344 = vst.msk [vmem:[#allocation2 + $0x8] sm:$0xff] %vm67, %v342
    // Predicated region
    $region30: #{tpu_custom_call.1} parent=1 // pred_check
      _
    $region31: #{tpu_custom_call.1} parent=1 // pred_check_branch
      %346 = sbr.rel (0) target = $region33
    $region32: #{tpu_custom_call.1} parent=1 // pred_region
      %s348 = ssub.s32 256, 256
      %349 = vsyncadd [#allocation3], %s348
      %s350 = sshll.u32 [#allocation2], 4
      %s351 = int_to_ptr.vmem [resolvable:$true] %s350
      %356 = dma.vmem_to_hbm [thread:$0]  %s351, 256, %s7, [#allocation3], 128, 128, 8
    $region33: #{tpu_custom_call.1} parent=1 // pred_fallthru
      _
    // Predicated region
    $region34: #{tpu_custom_call.1} parent=1 // pred_check
      _
    $region35: #{tpu_custom_call.1} parent=1 // pred_check_branch
      %358 = sbr.rel (0) target = $region37
    $region36: #{tpu_custom_call.1} parent=1 // pred_region
      %359 = dma.done [#allocation3], 256
    $region37: #{tpu_custom_call.1} parent=1 // pred_fallthru
      _
    %360 = vsyncpa [#allocation3], 1

</llo_original>
